<compile_context>
chip_gen: v7x
topology: tpu7x:2x2x1
jax: 0.10.0
libtpu: 0.0.40
codegen_flags: <defaults>
</compile_context>

<pallas_src>
import math

import jax
import jax.numpy as jnp
from jax.experimental import pallas as pl
from jax.experimental.pallas import tpu as pltpu


def _round_up(x, m):
    return ((x + m - 1) // m) * m


def _vmem_capacity_bytes():
    """Generation-aware VMEM size (128 MiB on v5e/v6e, 64 MiB per TC on v7x)."""
    try:
        return int(pltpu.get_tpu_info().vmem_capacity_bytes)
    except Exception:
        return 64 << 20  # conservative fallback = smallest generation (v7x)


def patch_embed_kernel(x_ref, w_ref, b_ref, o_ref):
    # x_ref: (tm, K) patches, w_ref: (K, te), b_ref: (1, te) f32, o_ref: (tm, te)
    acc = jnp.dot(x_ref[...], w_ref[...], preferred_element_type=jnp.float32)
    o_ref[...] = (acc + b_ref[...]).astype(o_ref.dtype)


def patch_embed(x, weight, bias, patch_size, *, compute_dtype=None,
                out_dtype=None, tm=None, te=None):
    """DiT PatchEmbed forward.

    x: (B, C, H, W) NCHW.  weight: (E, C, p, p).  bias: (E,).
    Returns (B, H/p * W/p, E), matching
    rearrange(Conv2d(C, E, stride=p, kernel=p)(x), 'b c h w -> b (h w) c').

    compute_dtype: operand dtype for the matmul (accumulation stays f32 in
      kernel).  bf16 halves operand HBM traffic; recommended default on v5e.
    out_dtype: output store dtype (default x.dtype).  This kernel is HBM
      bandwidth bound (K = C*p*p is tiny), so a bf16 output is ~2x less of the
      dominant traffic.
    """
    B, C, H, W = x.shape
    E = weight.shape[0]
    p = patch_size
    assert H % p == 0 and W % p == 0
    Hp, Wp = H // p, W // p
    N = Hp * Wp
    K = C * p * p
    M = B * N

    cdt = jnp.dtype(compute_dtype) if compute_dtype is not None else jnp.dtype(x.dtype)
    odt = jnp.dtype(out_dtype) if out_dtype is not None else jnp.dtype(x.dtype)
    in_isz = cdt.itemsize
    out_isz = odt.itemsize

    # --- glue: extract non-overlapping patches, flatten in (c, i, j) order ---
    # Cast first so the convert fuses into the transpose pass (narrow writes).
    # TODO(synk): patch extraction could be fully fused into the kernel (block
    # of shape (1, C, p, W) per (b, patch-row) grid step, flattened in VMEM);
    # negligible for DiT latents (K small) so it stays as XLA glue here.
    xc = x.astype(cdt)
    patches = xc.reshape(B, C, Hp, p, Wp, p)
    patches = jnp.transpose(patches, (0, 2, 4, 1, 3, 5)).reshape(M, K)
    w_mat = weight.reshape(E, K).T.astype(cdt)           # (K, E)
    b_mat = bias.astype(jnp.float32).reshape(1, E)       # f32 bias, added post-accumulate

    # --- tile selection (no explicit padding: Pallas masks ragged blocks) ----
    # Sublane packing: 8 rows for 32-bit, 16 for bf16, 32 for int8/fp8.
    sub_pack = max(1, 4 // in_isz) * 8
    vmem_budget = int(_vmem_capacity_bytes() * 0.55)

    def _step_bytes(tm_, te_):
        # double-buffered patch / weight / bias / output tiles
        return 2 * (tm_ * K * in_isz + K * te_ * in_isz + te_ * 4 + tm_ * te_ * out_isz)

    if tm is None:
        tm = min(1024, _round_up(M, sub_pack))
    else:
        tm = _round_up(tm, sub_pack)
    assert tm % sub_pack == 0

    if te is None:
        te = _round_up(E, 128)                           # lane-dense even for E < 128
        while te > 128 and _step_bytes(tm, te) > vmem_budget:
            te = max(128, _round_up(te // 2, 128))       # shrink te first, keep tm big
    else:
        te = _round_up(te, 128)
    while tm > 256 and _step_bytes(tm, te) > vmem_budget:
        tm = max(256, _round_up(tm // 2, sub_pack))      # last resort only

    grid_m = pl.cdiv(M, tm)
    grid_e = pl.cdiv(E, te)

    step_bytes = _step_bytes(tm, te)
    vmem_limit = int(min(max(step_bytes + (2 << 20), 16 << 20), vmem_budget))
    vmem_limit = max(vmem_limit, step_bytes + (1 << 20))

    cost = pl.CostEstimate(
        flops=2 * M * K * E,
        transcendentals=0,
        bytes_accessed=(M * K * in_isz                       # patches: read once (E-inner, resident)
                        + grid_m * (K * E * in_isz + E * 4)  # weights/bias re-streamed per M tile
                        + M * E * out_isz))

    out = pl.pallas_call(
        patch_embed_kernel,
        out_shape=jax.ShapeDtypeStruct((M, E), odt),
        # E innermost: the (tm, K) patch tile is resident; only the small
        # (K, te) weight tiles re-stream.  grid_m leads so megacore (v7x)
        # shards the long axis across TensorCores.
        grid=(grid_m, grid_e),
        in_specs=[
            pl.BlockSpec((tm, K), lambda im, je: (im, 0)),
            pl.BlockSpec((K, te), lambda im, je: (0, je)),
            pl.BlockSpec((1, te), lambda im, je: (0, je)),
        ],
        out_specs=pl.BlockSpec((tm, te), lambda im, je: (im, je)),
        compiler_params=pltpu.CompilerParams(
            dimension_semantics=("parallel", "parallel"),
            vmem_limit_bytes=vmem_limit),
        cost_estimate=cost,
    )(patches, w_mat, b_mat)

    return out.reshape(B, N, E)


def init_params(key, patch_size, channels, embed_dim, dtype=jnp.float32):
    """Deterministic xavier_uniform on the (E, C*p*p) flattened view; zero bias."""
    fan_out = embed_dim
    fan_in = channels * patch_size * patch_size
    bound = math.sqrt(6.0 / (fan_in + fan_out))
    w = jax.random.uniform(key, (embed_dim, channels, patch_size, patch_size),
                           dtype=dtype, minval=-bound, maxval=bound)
    b = jnp.zeros((embed_dim,), dtype=dtype)
    return w, b


def _ref_patch_embed(x, weight, bias, p):
    """Plain-JAX reference: strided conv == patch matmul, then b c h w -> b (h w) c."""
    B, C, H, W = x.shape
    E = weight.shape[0]
    Hp, Wp = H // p, W // p
    ref = jax.lax.conv_general_dilated(
        x.astype(jnp.float32), weight.astype(jnp.float32),
        window_strides=(p, p), padding="VALID",
        dimension_numbers=("NCHW", "OIHW", "NCHW"))
    ref = ref + bias.astype(jnp.float32).reshape(1, E, 1, 1)
    return jnp.transpose(ref.reshape(B, E, Hp * Wp), (0, 2, 1))


def _struct_bf16_ref(x, weight, bias, p):
    """Structural reference for the bf16 path: f32 matmul of bf16-cast operands."""
    B, C, H, W = x.shape
    E = weight.shape[0]
    Hp, Wp = H // p, W // p
    K = C * p * p
    xb = x.astype(jnp.bfloat16).astype(jnp.float32)
    pr = xb.reshape(B, C, Hp, p, Wp, p)
    pr = jnp.transpose(pr, (0, 2, 4, 1, 3, 5)).reshape(B * Hp * Wp, K)
    wb = weight.reshape(E, K).T.astype(jnp.bfloat16).astype(jnp.float32)
    out = pr @ wb + bias.astype(jnp.float32).reshape(1, E)
    return out.reshape(B, Hp * Wp, E)


if __name__ == "__main__":
    # 1) primary small config consistent with the module (f32 end to end)
    B, C, H, W = 2, 4, 16, 16
    patch_size = 4
    embed_dim = 32

    key = jax.random.PRNGKey(0)
    k_w, k_x, k_w2, k_x2 = jax.random.split(key, 4)

    weight, bias = init_params(k_w, patch_size, C, embed_dim)
    x = jax.random.normal(k_x, (B, C, H, W), dtype=jnp.float32)

    out = jax.block_until_ready(patch_embed(x, weight, bias, patch_size))
    ref = _ref_patch_embed(x, weight, bias, patch_size)
    assert out.shape == (B, (H // patch_size) * (W // patch_size), embed_dim)
    assert out.dtype == x.dtype
    assert jnp.allclose(out, ref, atol=1e-5, rtol=1e-5)

    # 2) bf16-operand fast path: loose check vs the f32 conv reference plus a
    #    tight structural check vs an f32 matmul of the bf16-cast operands
    #    (catches packing/relayout bugs the loose tolerance would hide).
    out_bf16 = jax.block_until_ready(
        patch_embed(x, weight, bias, patch_size, compute_dtype=jnp.bfloat16))
    assert out_bf16.shape == out.shape and out_bf16.dtype == jnp.float32
    assert jnp.allclose(out_bf16, ref, atol=1e-1, rtol=1e-1)
    ref_struct = _struct_bf16_ref(x, weight, bias, patch_size)
    assert jnp.allclose(out_bf16, ref_struct, atol=1e-4, rtol=1e-4)

    # 3) bf16 output dtype (downstream-activation dtype): halves output traffic.
    out_bf16o = jax.block_until_ready(
        patch_embed(x, weight, bias, patch_size,
                    compute_dtype=jnp.bfloat16, out_dtype=jnp.bfloat16))
    assert out_bf16o.dtype == jnp.bfloat16
    assert jnp.allclose(out_bf16o.astype(jnp.float32), ref, atol=1e-1, rtol=1e-1)

    # 4) ragged / multi-tile config: M=75 with tm=16 (grid_m=5, ragged last M
    #    block), E=160 with te=128 (grid_e=2, ragged last E block) — exercises
    #    the masked trailing blocks and the E-inner resident-patch-tile grid.
    B2, C2, H2, W2, p2, E2 = 3, 4, 20, 20, 4, 160
    w2, b2 = init_params(k_w2, p2, C2, E2)
    b2 = b2 + 0.5  # nonzero bias to exercise the in-kernel broadcast add
    x2 = jax.random.normal(k_x2, (B2, C2, H2, W2), dtype=jnp.float32)
    out2 = jax.block_until_ready(patch_embed(x2, w2, b2, p2, tm=16, te=128))
    ref2 = _ref_patch_embed(x2, w2, b2, p2)
    assert out2.shape == (B2, (H2 // p2) * (W2 // p2), E2)
    assert jnp.allclose(out2, ref2, atol=1e-4, rtol=1e-4)

    print("KERNEL_OK")
</pallas_src>

<mosaic_0001>
module attributes {stable_mosaic.version = 11 : i64} {
  func.func @patch_embed_kernel(%arg0: i32, %arg1: i32, %arg2: memref<32x64xf32, #tpu.memory_space<vmem>>, %arg3: memref<64x128xf32, #tpu.memory_space<vmem>>, %arg4: memref<1x128xf32, #tpu.memory_space<vmem>>, %arg5: memref<32x128xf32, #tpu.memory_space<vmem>>) attributes {dimension_semantics = [#tpu.dimension_semantics<parallel>, #tpu.dimension_semantics<parallel>], iteration_bounds = array<i64: 1, 1>, scalar_prefetch = 0 : i64, scratch_operands = 0 : i64, tpu.core_type = #tpu.core_type<tc>, window_params = [{transform_indices = @transform_0, window_bounds = array<i64: 32, 64>}, {transform_indices = @transform_1, window_bounds = array<i64: 64, 128>}, {transform_indices = @transform_2, window_bounds = array<i64: 1, 128>}, {transform_indices = @transform_3, window_bounds = array<i64: 32, 128>}]} {
    %c0 = arith.constant 0 : index
    %c0_0 = arith.constant 0 : index
    %0 = vector.load %arg2[%c0, %c0_0] : memref<32x64xf32, #tpu.memory_space<vmem>>, vector<32x64xf32>
    %c0_1 = arith.constant 0 : index
    %c0_2 = arith.constant 0 : index
    %1 = vector.load %arg3[%c0_1, %c0_2] : memref<64x128xf32, #tpu.memory_space<vmem>>, vector<64x128xf32>
    %cst = arith.constant dense<0.000000e+00> : vector<32x128xf32>
    %2 = tpu.matmul %0, %1, %cst {dimension_numbers = #tpu.dot_dimension_numbers<[1], [0], [0], [1], [0, 0, 1, 1], [], []>} : vector<32x64xf32>, vector<64x128xf32>, vector<32x128xf32> -> vector<32x128xf32>
    %c0_3 = arith.constant 0 : index
    %c0_4 = arith.constant 0 : index
    %3 = vector.load %arg4[%c0_3, %c0_4] : memref<1x128xf32, #tpu.memory_space<vmem>>, vector<1x128xf32>
    %4 = vector.broadcast %3 : vector<1x128xf32> to vector<32x128xf32>
    %5 = arith.addf %2, %4 : vector<32x128xf32>
    %c0_5 = arith.constant 0 : index
    %c0_6 = arith.constant 0 : index
    %6 = vector.load %arg5[%c0_5, %c0_6] : memref<32x128xf32, #tpu.memory_space<vmem>>, vector<32x128xf32>
    tpu.vector_store %arg5[%c0_5, %c0_6], %5 {strides = array<i32>} : memref<32x128xf32, #tpu.memory_space<vmem>>, vector<32x128xf32>,
    return
  }
  func.func @transform_0(%arg0: i32, %arg1: i32) -> (i32, i32) {
    %c0_i32 = arith.constant 0 : i32
    %c0_i32_0 = arith.constant 0 : i32
    return %arg0, %c0_i32 : i32, i32
  }
  func.func @transform_1(%arg0: i32, %arg1: i32) -> (i32, i32) {
    %c0_i32 = arith.constant 0 : i32
    %c0_i32_0 = arith.constant 0 : i32
    return %c0_i32, %arg1 : i32, i32
  }
  func.func @transform_2(%arg0: i32, %arg1: i32) -> (i32, i32) {
    %c0_i32 = arith.constant 0 : i32
    %c0_i32_0 = arith.constant 0 : i32
    return %c0_i32, %arg1 : i32, i32
  }
  func.func @transform_3(%arg0: i32, %arg1: i32) -> (i32, i32) {
    %c0_i32 = arith.constant 0 : i32
    return %arg0, %arg1 : i32, i32
  }
}

</mosaic_0001>

<llo_original>
// kernel: tpu_custom_call.1
$region0: #{tpu_custom_call.1}
  #allocation0 [shape = 'u32[]', space=smem, size = 0x4, offset = 0x4, fixed_abs, tag = 'smem constant byte address 0x4 - core index']
  #allocation1 [shape = 'u32[144,128]{1,0:T(1,128)}', space=vmem, size = 0x12000, scoped, tag = 'internal scratch']
  %s0 = inlined_call_operand.vmem [shape: f32[32,64], index: 0, kind: input, shape index: {}]
  %s1 = inlined_call_operand.vmem [shape: f32[64,32], index: 1, kind: input, shape index: {}]
  %s2 = inlined_call_operand.vmem [shape: f32[1,32], index: 2, kind: input, shape index: {}]
  %s3 = inlined_call_operand.hbm [shape: f32[32,32], index: 3, kind: output, shape index: {}]
  %s4 = sld [smem:[#allocation0]]
  $region22: #{tpu_custom_call.1} parent=0
    _
  %s6 = ssub.s32 1, %s4
  %s7 = scalar_select 0, %s6, %s4
  $region1: #{tpu_custom_call.1} parent=0
    #allocation2 [shape = 'u8[16384]{0}', space=vmem, size = 0x4000, scoped, tag = 'output window, operand 0, single buffered']
    #allocation3 [shape = 's32[1]{0}', space=sflag, size = 0x4, scoped, tag = 'scoped memory for tpu_custom_call.1']
    %8 = vsyncpa [#allocation3], 0
    // Predicated region
    $region2: #{tpu_custom_call.1} parent=1 // pred_check
      _
    $region3: #{tpu_custom_call.1} parent=1 // pred_check_branch
      %10 = sbr.rel (0) target = $region5
    $region4: #{tpu_custom_call.1} parent=1 // pred_region
      _
    $region5: #{tpu_custom_call.1} parent=1 // pred_fallthru
      _
    // Predicated region
    $region6: #{tpu_custom_call.1} parent=1 // pred_check
      _
    $region7: #{tpu_custom_call.1} parent=1 // pred_check_branch
      %12 = sbr.rel (0) target = $region9
    $region8: #{tpu_custom_call.1} parent=1 // pred_region
      _
    $region9: #{tpu_custom_call.1} parent=1 // pred_fallthru
      _
    // Predicated region
    $region10: #{tpu_custom_call.1} parent=1 // pred_check
      _
    $region11: #{tpu_custom_call.1} parent=1 // pred_check_branch
      %14 = sbr.rel (0) target = $region13
    $region12: #{tpu_custom_call.1} parent=1 // pred_region
      _
    $region13: #{tpu_custom_call.1} parent=1 // pred_fallthru
      _
    %v15 = vld [vmem:[%s0] sm:$0xff]
    %v16 = vld [vmem:[%s0 + $0x8] sm:$0xff]
    %v17 = vld [vmem:[%s0 + $0x10] sm:$0xff]
    %v18 = vld [vmem:[%s0 + $0x18] sm:$0xff]
    %v19 = vld [vmem:[%s1] sm:$0xff]
    %v20 = vld [vmem:[%s1 + $0x8] sm:$0xff]
    %v21 = vld [vmem:[%s1 + $0x10] sm:$0xff]
    %v22 = vld [vmem:[%s1 + $0x18] sm:$0xff]
    %v23 = vld [vmem:[%s1 + $0x20] sm:$0xff]
    %v24 = vld [vmem:[%s1 + $0x28] sm:$0xff]
    %v25 = vld [vmem:[%s1 + $0x30] sm:$0xff]
    %v26 = vld [vmem:[%s1 + $0x38] sm:$0xff]
    %v27 = vld [vmem:[%s2] sm:$0x1]
    %v29 = vlaneseq
    %v30 = vshrl.u32 %v29, 7
    %v31 = vsub.s32 0, %v30
    %v32 = vrot.slane %v27, %v31
    %vm34 = vcmask 523264
    %v36 = vsel %vm34, %v15, 0
    %v39 = vsel %vm34, %v16, 0
    %v42 = vsel %vm34, %v17, 0
    %v45 = vsel %vm34, %v18, 0
    %47 = vmatprep.subr.mxu0 0.0
    %48 = vmatpush1.msra.mxu0 %v19
    %49 = vmatprep.subr.mxu0 0.0
    %50 = vmatpush1.msra.mxu0 %v20
    %51 = vmatprep.subr.mxu0 0.0
    %52 = vmatpush1.msra.mxu0 %v21
    %53 = vmatprep.subr.mxu0 0.0
    %54 = vmatpush1.msra.mxu0 %v22
    %55 = vmatprep.subr.mxu0 0.0
    %56 = vmatpush1.msra.mxu0 %v23
    %57 = vmatprep.subr.mxu0 0.0
    %58 = vmatpush1.msra.mxu0 %v24
    %59 = vmatprep.subr.mxu0 0.0
    %60 = vmatpush1.msra.mxu0 %v25
    %61 = vmatprep.subr.mxu0 0.0
    %62 = vmatpush1.msra.mxu0 %v26
    %63 = vmatprep.subr.mxu0 0.0
    %64 = vmatpush1.msra.mxu0 0.0
    %65 = vmatprep.subr.mxu0 0.0
    %66 = vmatpush1.msra.mxu0 0.0
    %67 = vmatprep.subr.mxu0 0.0
    %68 = vmatpush1.msra.mxu0 0.0
    %69 = vmatprep.subr.mxu0 0.0
    %70 = vmatpush1.msra.mxu0 0.0
    %71 = vmatprep.subr.mxu0 0.0
    %72 = vmatpush1.msra.mxu0 0.0
    %73 = vmatprep.subr.mxu0 0.0
    %74 = vmatpush1.msra.mxu0 0.0
    %75 = vmatprep.subr.mxu0 0.0
    %76 = vmatpush1.msra.mxu0 0.0
    %77 = vmatprep.subr.mxu0 0.0
    %78 = vmatpush1.msra.mxu0 0.0
    %79 = vmatprep.subr.mxu0 0.0
    %80 = vmatpush1.msra.mxu0 0.0
    %81 = vmatprep.subr.mxu0 0.0
    %82 = vmatpush1.msra.mxu0 0.0
    %83 = vmatprep.subr.mxu0 0.0
    %84 = vmatpush1.msra.mxu0 0.0
    %85 = vmatprep.subr.mxu0 0.0
    %86 = vmatpush1.msra.mxu0 0.0
    %87 = vmatprep.subr.mxu0 0.0
    %88 = vmatpush1.msra.mxu0 0.0
    %89 = vmatprep.subr.mxu0 0.0
    %90 = vmatpush1.msra.mxu0 0.0
    %91 = vmatprep.subr.mxu0 0.0
    %92 = vmatpush1.msra.mxu0 0.0
    %93 = vmatprep.subr.mxu0 0.0
    %94 = vmatpush1.msra.mxu0 0.0
    %95 = vmatprep.subr.mxu0 0.0
    %96 = vmatpush1.msra.mxu0 0.0
    %97 = vmatprep.subr.mxu0 0.0
    %98 = vmatpush1.msra.mxu0 0.0
    %99 = vmatprep.subr.mxu0 0.0
    %100 = vmatpush1.msra.mxu0 0.0
    %101 = vmatprep.subr.mxu0 0.0
    %102 = vmatpush1.msra.mxu0 0.0
    %103 = vmatprep.subr.mxu0 0.0
    %104 = vmatpush1.msra.mxu0 0.0
    %105 = vmatprep.subr.mxu0 0.0
    %106 = vmatpush1.msra.mxu0 0.0
    %107 = vmatprep.subr.mxu0 0.0
    %108 = vmatpush1.msra.mxu0 0.0
    %109 = vmatprep.subr.mxu0 0.0
    %110 = vmatpush1.msra.mxu0 0.0
    %111 = vmatprep.mubr.f32.mxu0 0.0
    %112 = vmatmul.mubr.f32.gmra.mrb[0].mxu0 %v36
    %v113 = vpop.f32.mrb[0].mxu0
    %v114 = vadd.f32 %v32, %v113
    %v115 = vpop.f32.mrb[0].mxu0
    %116 = vmatprep.mubr.f32.mxu0 0.0
    %117 = vmatmul.mubr.f32.gmra.mrb[0].mxu0 %v39
    %v118 = vpop.f32.mrb[0].mxu0
    %v119 = vadd.f32 %v32, %v118
    %v120 = vpop.f32.mrb[0].mxu0
    %121 = vmatprep.mubr.f32.mxu0 0.0
    %122 = vmatmul.mubr.f32.gmra.mrb[0].mxu0 %v42
    %v123 = vpop.f32.mrb[0].mxu0
    %v124 = vadd.f32 %v32, %v123
    %v125 = vpop.f32.mrb[0].mxu0
    %126 = vmatprep.mubr.f32.mxu0 0.0
    %127 = vmatmul.mubr.f32.gmra.mrb[0].mxu0 %v45
    %v128 = vpop.f32.mrb[0].mxu0
    %v129 = vadd.f32 %v32, %v128
    %v130 = vpop.f32.mrb[0].mxu0
    %131 = vdwg.mxu0
    %132 = vst [vmem:[#allocation2] sm:$0xff] %v114
    %133 = vst [vmem:[#allocation2 + $0x8] sm:$0xff] %v119
    %134 = vst [vmem:[#allocation2 + $0x10] sm:$0xff] %v124
    %135 = vst [vmem:[#allocation2 + $0x18] sm:$0xff] %v129
    // Predicated region
    $region14: #{tpu_custom_call.1} parent=1 // pred_check
      _
    $region15: #{tpu_custom_call.1} parent=1 // pred_check_branch
      %137 = sbr.rel (0) target = $region17
    $region16: #{tpu_custom_call.1} parent=1 // pred_region
      %s139 = ssub.s32 512, 512
      %140 = vsyncadd [#allocation3], %s139
      %s141 = sshll.u32 [#allocation2], 4
      %s142 = int_to_ptr.vmem [resolvable:$true] %s141
      %147 = dma.vmem_to_hbm [thread:$0]  %s142, 512, %s3, [#allocation3], 128, 128, 8
    $region17: #{tpu_custom_call.1} parent=1 // pred_fallthru
      _
    // Predicated region
    $region18: #{tpu_custom_call.1} parent=1 // pred_check
      _
    $region19: #{tpu_custom_call.1} parent=1 // pred_check_branch
      %149 = sbr.rel (0) target = $region21
    $region20: #{tpu_custom_call.1} parent=1 // pred_region
      %150 = dma.done [#allocation3], 512
    $region21: #{tpu_custom_call.1} parent=1 // pred_fallthru
      _
    %151 = vsyncpa [#allocation3], 1

</llo_original>
